<compile_context>
chip_gen: v5e
topology: v5e:2x2
jax: 0.10.0
libtpu: 0.0.40
codegen_flags: <defaults>
</compile_context>

<pallas_src>
import jax
import jax.numpy as jnp
from jax import lax
from jax.experimental import pallas as pl
from jax.experimental.pallas import tpu as pltpu


_IGNORE_INDEX = -100                  # nn.CrossEntropyLoss default
_VMEM_LIMIT = 32 * 1024 * 1024        # explicit scoped-VMEM limit (all gens)
_VMEM_BUDGET = 20 * 1024 * 1024       # per-tile working-set target (headroom)


def _ce_kernel(n_valid_ref, logits_ref, targets_ref, sum_ref, cnt_ref):
    # logits_ref: (TB, C) VMEM, native dtype; targets_ref: (TB, 1) int32 VMEM
    # sum_ref/cnt_ref: (1, 8, 128) f32 VMEM -- lane-dense per-tile partials.
    i = pl.program_id(0)
    x = logits_ref[...]                                   # (TB, C) native dtype
    t = targets_ref[...]                                  # (TB, 1) int32
    tb, c = x.shape
    n_valid = n_valid_ref[0]

    # Row max and target-logit gather in the native dtype (max/select are order
    # ops, and only one lane per row is non-zero, so both are exact in bf16).
    x_max = jnp.max(x, axis=-1, keepdims=True).astype(jnp.float32)      # (TB,1)
    class_ids = lax.broadcasted_iota(jnp.int32, (tb, c), 1)             # (TB,C)
    x_tgt = jnp.sum(jnp.where(class_ids == t, x, 0),
                    axis=-1, keepdims=True).astype(jnp.float32)         # (TB,1)

    # Numerically-stable log-sum-exp; only this path is f32.
    xf = x.astype(jnp.float32)
    sum_exp = jnp.sum(jnp.exp(xf - x_max), axis=-1, keepdims=True)      # (TB,1)
    nll = x_max + jnp.log(sum_exp) - x_tgt                              # (TB,1)

    # Mask ragged-last-block garbage rows and ignore_index rows (keep this mask
    # AFTER all row-wise math so NaN/Inf in garbage rows never escapes).
    row_ids = i * tb + lax.broadcasted_iota(jnp.int32, (tb, 1), 0)      # (TB,1)
    valid = (row_ids < n_valid) & (t != _IGNORE_INDEX)                  # (TB,1)
    nll = jnp.where(valid, nll, 0.0)

    sum_ref[...] = jnp.broadcast_to(jnp.sum(nll), sum_ref.shape)
    cnt_ref[...] = jnp.broadcast_to(jnp.sum(valid.astype(jnp.float32)),
                                    cnt_ref.shape)


def _round_up(x, m):
    return ((x + m - 1) // m) * m


def _choose_tb(B, C, itemsize):
    # Per-row VMEM bytes:
    #   2 * C * itemsize   double-buffered native-dtype logits tile
    #   4 * C * 4          f32 (TB,C) temps: x_f32, exp(shifted), iota, select
    #   2 * 128 * 4        (TB,1) int32 targets tile (lanes pad to 128), 2 bufs
    per_row = 2 * C * itemsize + 4 * C * 4 + 1024
    tb = _VMEM_BUDGET // per_row
    tb = min(tb, _round_up(B, 8))
    # Prefer >= 2 tiles on large batches so the "parallel" batch axis can feed
    # both TensorCores on v7x.
    if B >= 2048 and tb >= B:
        tb = _round_up((B + 1) // 2, 8)
    return max(8, (tb // 8) * 8)


def cross_entropy_pallas(logits, targets, tb=None):
    """logits: (B, C) float (any dtype), targets: (B,) int -> scalar mean NLL."""
    B, C = logits.shape
    if tb is None:
        tb = _choose_tb(B, C, logits.dtype.itemsize)
    tb = max(8, (min(tb, _round_up(B, 8)) // 8) * 8)
    nb = pl.cdiv(B, tb)                       # ragged last block handled in-kernel

    targets2d = targets.astype(jnp.int32).reshape(B, 1)
    n_valid = jnp.array([B], dtype=jnp.int32)  # SMEM scalar prefetch

    sums, cnts = pl.pallas_call(
        _ce_kernel,
        out_shape=(
            jax.ShapeDtypeStruct((nb, 8, 128), jnp.float32),
            jax.ShapeDtypeStruct((nb, 8, 128), jnp.float32),
        ),
        grid_spec=pltpu.PrefetchScalarGridSpec(
            num_scalar_prefetch=1,
            grid=(nb,),
            in_specs=[
                pl.BlockSpec((tb, C), lambda i, nv: (i, 0)),
                pl.BlockSpec((tb, 1), lambda i, nv: (i, 0)),
            ],
            out_specs=[
                pl.BlockSpec((1, 8, 128), lambda i, nv: (i, 0, 0)),
                pl.BlockSpec((1, 8, 128), lambda i, nv: (i, 0, 0)),
            ],
        ),
        compiler_params=pltpu.CompilerParams(
            dimension_semantics=("parallel",),
            vmem_limit_bytes=_VMEM_LIMIT,
        ),
    )(n_valid, logits, targets2d)

    # Tiny finalization in plain JAX (keeps the batch axis 'parallel' in-kernel).
    total = jnp.sum(sums[:, 0, 0])
    count = jnp.sum(cnts[:, 0, 0])
    return total / count


def custom_ce_loss_forward(logits, targets, N=None, params=None):
    """Pallas equivalent of CustomCELoss.forward with ce = nn.CrossEntropyLoss()."""
    nll = cross_entropy_pallas(logits, targets)
    return {"loss": nll, "nll": nll, "prior": jnp.float32(0.0)}


def _ref_ce(logits, targets, ignore_index=_IGNORE_INDEX):
    logp = jax.nn.log_softmax(logits.astype(jnp.float32), axis=-1)
    valid = targets != ignore_index
    safe_t = jnp.where(valid, targets, 0)
    nll = -logp[jnp.arange(logits.shape[0]), safe_t]
    nll = jnp.where(valid, nll, 0.0)
    return jnp.sum(nll) / jnp.sum(valid.astype(jnp.float32))


if __name__ == "__main__":
    key = jax.random.PRNGKey(0)
    k1, k2, k3, k4, k5, k6 = jax.random.split(key, 6)

    # small shapes consistent with the module: batch=8, num_classes=32
    B, C = 8, 32
    logits = jax.random.normal(k1, (B, C), dtype=jnp.float32)
    targets = jax.random.randint(k2, (B,), 0, C, dtype=jnp.int32)

    out = custom_ce_loss_forward(logits, targets)
    jax.block_until_ready(out["loss"])
    ref = _ref_ce(logits, targets)
    assert jnp.allclose(out["loss"], ref, atol=1e-5, rtol=1e-5), (out["loss"], ref)
    assert jnp.allclose(out["nll"], out["loss"])
    assert out["prior"] == 0.0

    # second check: ragged last block (40 rows, tb=16 -> 3 tiles, last partial,
    # no wrapper-side padding) plus an ignore_index=-100 row.
    B2, C2 = 40, 160
    logits2 = jax.random.normal(k3, (B2, C2), dtype=jnp.float32)
    targets2 = jax.random.randint(k4, (B2,), 0, C2, dtype=jnp.int32)
    targets2 = targets2.at[7].set(_IGNORE_INDEX)
    loss2 = cross_entropy_pallas(logits2, targets2, tb=16)
    jax.block_until_ready(loss2)
    ref2 = _ref_ce(logits2, targets2)
    assert jnp.allclose(loss2, ref2, atol=1e-5, rtol=1e-5), (loss2, ref2)

    # third check: bf16 logits stream in native dtype (max / one-hot gather in
    # bf16, exp/sum/log in f32).
    B3, C3 = 24, 128
    logits3 = jax.random.normal(k5, (B3, C3), dtype=jnp.float32).astype(jnp.bfloat16)
    targets3 = jax.random.randint(k6, (B3,), 0, C3, dtype=jnp.int32)
    loss3 = cross_entropy_pallas(logits3, targets3)
    jax.block_until_ready(loss3)
    ref3 = _ref_ce(logits3, targets3)
    assert jnp.allclose(loss3, ref3, atol=2e-3, rtol=2e-3), (loss3, ref3)

    print("KERNEL_OK")
</pallas_src>

<mosaic_0001>
module attributes {stable_mosaic.version = 11 : i64} {
  func.func @_ce_kernel(%arg0: i32, %arg1: memref<1xi32, #tpu.memory_space<smem>>, %arg2: memref<8x32xf32, #tpu.memory_space<vmem>>, %arg3: memref<8x1xi32, #tpu.memory_space<vmem>>, %arg4: memref<1x8x128xf32, #tpu.memory_space<vmem>>, %arg5: memref<1x8x128xf32, #tpu.memory_space<vmem>>) attributes {dimension_semantics = [#tpu.dimension_semantics<parallel>], iteration_bounds = array<i64: 1>, scalar_prefetch = 1 : i64, scratch_operands = 0 : i64, tpu.core_type = #tpu.core_type<tc>, window_params = [{transform_indices = @transform_0, window_bounds = array<i64: 8, 32>}, {transform_indices = @transform_1, window_bounds = array<i64: 8, 1>}, {transform_indices = @transform_2, window_bounds = array<i64: 1, 8, 128>}, {transform_indices = @transform_3, window_bounds = array<i64: 1, 8, 128>}]} {
    %c0 = arith.constant 0 : index
    %c0_0 = arith.constant 0 : index
    %0 = vector.load %arg2[%c0, %c0_0] : memref<8x32xf32, #tpu.memory_space<vmem>>, vector<8x32xf32>
    %c0_1 = arith.constant 0 : index
    %c0_2 = arith.constant 0 : index
    %1 = vector.load %arg3[%c0_1, %c0_2] : memref<8x1xi32, #tpu.memory_space<vmem>>, vector<8x1xi32>
    %c0_3 = arith.constant 0 : index
    %2 = memref.load %arg1[%c0_3] : memref<1xi32, #tpu.memory_space<smem>>
    %cst = arith.constant dense<0xFF800000> : vector<8xf32>
    %3 = vector.multi_reduction <maximumf>, %0, %cst [1] : vector<8x32xf32> to vector<8xf32>
    %4 = vector.shape_cast %3 : vector<8xf32> to vector<8x1xf32>
    %5 = tpu.iota {dimensions = array<i32: 1>} : vector<8x32xi32>
    %6 = vector.broadcast %1 : vector<8x1xi32> to vector<8x32xi32>
    %7 = arith.cmpi eq, %5, %6 : vector<8x32xi32>
    %c0_i32 = arith.constant 0 : i32
    %8 = arith.sitofp %c0_i32 : i32 to f32
    %9 = vector.broadcast %8 : f32 to vector<8x32xf32>
    %10 = arith.select %7, %0, %9 : vector<8x32xi1>, vector<8x32xf32>
    %cst_4 = arith.constant dense<0.000000e+00> : vector<8xf32>
    %11 = vector.multi_reduction <add>, %10, %cst_4 [1] : vector<8x32xf32> to vector<8xf32>
    %12 = vector.shape_cast %11 : vector<8xf32> to vector<8x1xf32>
    %13 = vector.broadcast %4 : vector<8x1xf32> to vector<8x32xf32>
    %14 = arith.subf %0, %13 : vector<8x32xf32>
    %15 = math.exp %14 : vector<8x32xf32>
    %cst_5 = arith.constant dense<0.000000e+00> : vector<8xf32>
    %16 = vector.multi_reduction <add>, %15, %cst_5 [1] : vector<8x32xf32> to vector<8xf32>
    %17 = vector.shape_cast %16 : vector<8xf32> to vector<8x1xf32>
    %18 = math.log %17 : vector<8x1xf32>
    %19 = arith.addf %4, %18 : vector<8x1xf32>
    %20 = arith.subf %19, %12 : vector<8x1xf32>
    %c8_i32 = arith.constant 8 : i32
    %21 = arith.muli %arg0, %c8_i32 : i32
    %22 = tpu.iota {dimensions = array<i32: 0>} : vector<8x1xi32>
    %23 = vector.broadcast %21 : i32 to vector<8x1xi32>
    %24 = arith.addi %23, %22 : vector<8x1xi32>
    %25 = vector.broadcast %2 : i32 to vector<8x1xi32>
    %26 = arith.cmpi slt, %24, %25 : vector<8x1xi32>
    %c-100_i32 = arith.constant -100 : i32
    %27 = vector.broadcast %c-100_i32 : i32 to vector<8x1xi32>
    %28 = arith.cmpi ne, %1, %27 : vector<8x1xi32>
    %29 = arith.andi %26, %28 : vector<8x1xi1>
    %cst_6 = arith.constant 0.000000e+00 : f32
    %30 = vector.broadcast %cst_6 : f32 to vector<8x1xf32>
    %31 = arith.select %29, %20, %30 : vector<8x1xi1>, vector<8x1xf32>
    %32 = vector.shape_cast %31 : vector<8x1xf32> to vector<1x8x1xf32>
    %cst_7 = arith.constant dense<0.000000e+00> : vector<1xf32>
    %33 = vector.multi_reduction <add>, %32, %cst_7 [1, 2] : vector<1x8x1xf32> to vector<1xf32>
    %34 = vector.shape_cast %33 : vector<1xf32> to vector<1x1x1xf32>
    %35 = vector.extract %34[0, 0, 0] : f32 from vector<1x1x1xf32>
    %36 = vector.broadcast %35 : f32 to vector<1x8x128xf32>
    %c0_8 = arith.constant 0 : index
    %c0_9 = arith.constant 0 : index
    %c0_10 = arith.constant 0 : index
    %37 = vector.load %arg4[%c0_8, %c0_9, %c0_10] : memref<1x8x128xf32, #tpu.memory_space<vmem>>, vector<1x8x128xf32>
    tpu.vector_store %arg4[%c0_8, %c0_9, %c0_10], %36 {strides = array<i32>} : memref<1x8x128xf32, #tpu.memory_space<vmem>>, vector<1x8x128xf32>,
    %38 = arith.extui %29 : vector<8x1xi1> to vector<8x1xi32>
    %39 = arith.sitofp %38 : vector<8x1xi32> to vector<8x1xf32>
    %40 = vector.shape_cast %39 : vector<8x1xf32> to vector<1x8x1xf32>
    %cst_11 = arith.constant dense<0.000000e+00> : vector<1xf32>
    %41 = vector.multi_reduction <add>, %40, %cst_11 [1, 2] : vector<1x8x1xf32> to vector<1xf32>
    %42 = vector.shape_cast %41 : vector<1xf32> to vector<1x1x1xf32>
    %43 = vector.extract %42[0, 0, 0] : f32 from vector<1x1x1xf32>
    %44 = vector.broadcast %43 : f32 to vector<1x8x128xf32>
    %c0_12 = arith.constant 0 : index
    %c0_13 = arith.constant 0 : index
    %c0_14 = arith.constant 0 : index
    %45 = vector.load %arg5[%c0_12, %c0_13, %c0_14] : memref<1x8x128xf32, #tpu.memory_space<vmem>>, vector<1x8x128xf32>
    tpu.vector_store %arg5[%c0_12, %c0_13, %c0_14], %44 {strides = array<i32>} : memref<1x8x128xf32, #tpu.memory_space<vmem>>, vector<1x8x128xf32>,
    return
  }
  func.func @transform_0(%arg0: i32, %arg1: memref<1xi32, #tpu.memory_space<smem>>) -> (i32, i32) {
    %c0_i32 = arith.constant 0 : i32
    %c0_i32_0 = arith.constant 0 : i32
    return %arg0, %c0_i32 : i32, i32
  }
  func.func @transform_1(%arg0: i32, %arg1: memref<1xi32, #tpu.memory_space<smem>>) -> (i32, i32) {
    %c0_i32 = arith.constant 0 : i32
    %c0_i32_0 = arith.constant 0 : i32
    return %arg0, %c0_i32 : i32, i32
  }
  func.func @transform_2(%arg0: i32, %arg1: memref<1xi32, #tpu.memory_space<smem>>) -> (i32, i32, i32) {
    %c0_i32 = arith.constant 0 : i32
    %c0_i32_0 = arith.constant 0 : i32
    %c0_i32_1 = arith.constant 0 : i32
    return %arg0, %c0_i32, %c0_i32_0 : i32, i32, i32
  }
  func.func @transform_3(%arg0: i32, %arg1: memref<1xi32, #tpu.memory_space<smem>>) -> (i32, i32, i32) {
    %c0_i32 = arith.constant 0 : i32
    %c0_i32_0 = arith.constant 0 : i32
    %c0_i32_1 = arith.constant 0 : i32
    return %arg0, %c0_i32, %c0_i32_0 : i32, i32, i32
  }
}

</mosaic_0001>

<llo_original>
// kernel: tpu_custom_call.1
$region0: #{tpu_custom_call.1}
  #allocation0 [shape = 'u32[]', space=smem, size = 0x4, offset = 0x4, fixed_abs, tag = 'smem constant byte address 0x4 - core index']
  #allocation1 [shape = 'u32[72,128]{1,0:T(1,128)}', space=vmem, size = 0x9000, scoped, tag = 'internal scratch']
  #allocation2 [shape = 's32[1]{0}', space=sflag, size = 0x4, scoped, tag = 'scoped memory for tpu_custom_call.1']
  #allocation3 [shape = 's32[1]{0:T(128)S(6)}', space=smem, size = 0x200, scoped, tag = 'prefetched SMEM operand 0']
  %s0 = inlined_call_operand.<no memory space> [shape: s32[1], index: 0, kind: input, shape index: {}]
  %s1 = inlined_call_operand.vmem [shape: f32[8,32], index: 1, kind: input, shape index: {}]
  %s2 = inlined_call_operand.vmem [shape: s32[8,1], index: 2, kind: input, shape index: {}]
  %s3 = inlined_call_operand.hbm [shape: f32[1,8,128], index: 3, kind: output, shape index: {0}]
  %s4 = inlined_call_operand.hbm [shape: f32[1,8,128], index: 4, kind: output, shape index: {1}]
  %5 = xla_tuple %s3, %s4
  %s6 = sld [smem:[#allocation0]]
  $region26: #{tpu_custom_call.1} parent=0
    _
  %s8 = ssub.s32 1, %s6
  %s9 = scalar_select 0, %s8, %s6
  %10 = sst [smem:[#allocation3]] %s0
  $region1: #{tpu_custom_call.1} parent=0
    #allocation4 [shape = 'u8[4096]{0}', space=vmem, size = 0x1000, scoped, tag = 'output window, operand 0, single buffered']
    #allocation5 [shape = 's32[1]{0}', space=sflag, size = 0x4, scoped, tag = 'scoped memory for tpu_custom_call.1']
    #allocation6 [shape = 'u8[4096]{0}', space=vmem, size = 0x1000, scoped, tag = 'output window, operand 1, single buffered']
    #allocation7 [shape = 's32[1]{0}', space=sflag, size = 0x4, scoped, tag = 'scoped memory for tpu_custom_call.1']
    %11 = vsyncpa [#allocation5], 0
    %12 = vsyncpa [#allocation7], 0
    // Predicated region
    $region2: #{tpu_custom_call.1} parent=1 // pred_check
      _
    $region3: #{tpu_custom_call.1} parent=1 // pred_check_branch
      %14 = sbr.rel (0) target = $region5
    $region4: #{tpu_custom_call.1} parent=1 // pred_region
      _
    $region5: #{tpu_custom_call.1} parent=1 // pred_fallthru
      _
    // Predicated region
    $region6: #{tpu_custom_call.1} parent=1 // pred_check
      _
    $region7: #{tpu_custom_call.1} parent=1 // pred_check_branch
      %16 = sbr.rel (0) target = $region9
    $region8: #{tpu_custom_call.1} parent=1 // pred_region
      _
    $region9: #{tpu_custom_call.1} parent=1 // pred_fallthru
      _
    %v17 = vld [vmem:[%s1] sm:$0xff]
    %v18 = vld [vmem:[%s2] sm:$0xff]
    %s19 = sld [smem:[#allocation3]]
    %vm20 = vcmask 261120
    %v21 = vsel %vm20, %v17, -inf
    %22 = vmax.xlane.f32.xlu0 %v21
    %v23 = vpop.xlane.xlu0 %22
    %v24 = vlaneseq
    %v25 = vand.u32 %v24, 127
    %26 = vset.pattern.permute.xlu0 0
    %27 = vperm.xlu0 %26, %v18
    %v28 = vpop.permute.xlu0 %27
    %vm29 = vcmp.eq.s32.totalorder %v25, %v28
    %v30 = vsel %vm29, %v17, 0.0
    %v31 = vsel %vm20, %v30, 0.0
    %32 = vadd.xlane.f32.xlu0 %v31
    %v33 = vpop.xlane.xlu0 %32
    %v34 = vsub.f32 %v17, %v23
    %v35 = vmul.f32 %v34, 1.442695
    %v36 = vpow.pop %v35
    %v37 = vsel %vm20, %v36, 0.0
    %38 = vadd.xlane.f32.xlu0 %v37
    %v39 = vpop.xlane.xlu0 %38
    %v40 = vlog2.pop %v39
    %v41 = vmul.f32 %v40, 0.6931472
    %v42 = vadd.f32 %v23, %v41
    %v43 = vsub.f32 %v42, %v33
    %s44 = smul.u32 0, 8
    %v45 = vlaneseq
    %v46 = vshrl.u32 %v45, 7
    %v47 = vstv %s44
    %v48 = vadd.s32 %v47, %v46
    %v49 = vstv %s19
    %vm50 = vcmp.lt.s32.totalorder %v48, %v49
    %vm51 = vcmp.ne.s32.totalorder %v18, 4294967196
    %vm52 = vmand %vm50, %vm51
    %v53 = vsel %vm52, %v43, 0.0
    %vm54 = vcmask 7168
    %v55 = vsel %vm54, %v53, 0.0
    %56 = vadd.xlane.f32.xlu0 %v55
    %v57 = vpop.xlane.xlu0 %56
    %v58 = vrot.slane %v57, 4
    %v59 = vadd.f32 %v57, %v58
    %v60 = vrot.slane %v59, 2
    %v61 = vadd.f32 %v59, %v60
    %v62 = vrot.slane %v61, 1
    %v63 = vadd.f32 %v61, %v62
    %s64 = vtos %v63
    %v65 = vstv %s64
    %66 = vst [vmem:[#allocation4] sm:$0xff] %v65
    %v67 = vsel %vm52, 1, 0
    %v68 = vcvt.s32.f32 %v67
    %v69 = vsel %vm54, %v68, 0.0
    %70 = vadd.xlane.f32.xlu0 %v69
    %v71 = vpop.xlane.xlu0 %70
    %v72 = vrot.slane %v71, 4
    %v73 = vadd.f32 %v71, %v72
    %v74 = vrot.slane %v73, 2
    %v75 = vadd.f32 %v73, %v74
    %v76 = vrot.slane %v75, 1
    %v77 = vadd.f32 %v75, %v76
    %s78 = vtos %v77
    %v79 = vstv %s78
    %80 = vst [vmem:[#allocation6] sm:$0xff] %v79
    // Predicated region
    $region10: #{tpu_custom_call.1} parent=1 // pred_check
      _
    $region11: #{tpu_custom_call.1} parent=1 // pred_check_branch
      %82 = sbr.rel (0) target = $region13
    $region12: #{tpu_custom_call.1} parent=1 // pred_region
      %84 = vsyncadd [#allocation5], 0
      %s86 = sshll.u32 [#allocation4], 4
      %s87 = int_to_ptr.vmem [resolvable:$true] %s86
      %s88 = sshll.u32 %s3, 4
      %s89 = int_to_ptr.hbm [resolvable:$true] %s88
      %91 = dma.vmem_to_hbm [thread:$0]  %s87, 128, %s89, [#allocation5]
    $region13: #{tpu_custom_call.1} parent=1 // pred_fallthru
      _
    // Predicated region
    $region14: #{tpu_custom_call.1} parent=1 // pred_check
      _
    $region15: #{tpu_custom_call.1} parent=1 // pred_check_branch
      %93 = sbr.rel (0) target = $region17
    $region16: #{tpu_custom_call.1} parent=1 // pred_region
      %95 = vsyncadd [#allocation7], 0
      %s97 = sshll.u32 [#allocation6], 4
      %s98 = int_to_ptr.vmem [resolvable:$true] %s97
      %s99 = sshll.u32 %s4, 4
      %s100 = int_to_ptr.hbm [resolvable:$true] %s99
      %102 = dma.vmem_to_hbm [thread:$0]  %s98, 128, %s100, [#allocation7]
    $region17: #{tpu_custom_call.1} parent=1 // pred_fallthru
      _
    // Predicated region
    $region18: #{tpu_custom_call.1} parent=1 // pred_check
      _
    $region19: #{tpu_custom_call.1} parent=1 // pred_check_branch
      %104 = sbr.rel (0) target = $region21
    $region20: #{tpu_custom_call.1} parent=1 // pred_region
      %106 = dma.done [#allocation5], 128
    $region21: #{tpu_custom_call.1} parent=1 // pred_fallthru
      _
    // Predicated region
    $region22: #{tpu_custom_call.1} parent=1 // pred_check
      _
    $region23: #{tpu_custom_call.1} parent=1 // pred_check_branch
      %108 = sbr.rel (0) target = $region25
    $region24: #{tpu_custom_call.1} parent=1 // pred_region
      %110 = dma.done [#allocation7], 128
    $region25: #{tpu_custom_call.1} parent=1 // pred_fallthru
      _
    %111 = vsyncpa [#allocation5], 1
    %112 = vsyncpa [#allocation7], 1

</llo_original>
